<compile_context>
chip_gen: v7x
topology: tpu7x:2x2x1
jax: 0.10.0
libtpu: 0.0.40
codegen_flags: <defaults>
</compile_context>

<pallas_src>
import functools

import jax
import jax.numpy as jnp
from jax.experimental import pallas as pl
from jax.experimental.pallas import tpu as pltpu


# ---------------------------------------------------------------------------
# Kernel
# ---------------------------------------------------------------------------
def _normalize_pair_kernel(ms_ref, pv_ref, art_ref, pv_o_ref, art_o_ref):
    # ms_ref: (TM, 2) f32 -> column 0 = mean, column 1 = 1/std, per row.
    # pv_ref/art_ref/*_o_ref: (TM, TL) lane-dense tiles.
    mean = ms_ref[:, 0:1]      # (TM, 1), broadcast across lanes
    inv_std = ms_ref[:, 1:2]   # (TM, 1)
    pv = pv_ref[...].astype(jnp.float32)
    art = art_ref[...].astype(jnp.float32)
    pv_o_ref[...] = ((pv - mean) * inv_std).astype(pv_o_ref.dtype)
    art_o_ref[...] = ((art - mean) * inv_std).astype(art_o_ref.dtype)


# ---------------------------------------------------------------------------
# Tiling policy
# ---------------------------------------------------------------------------
def _cdiv(a, b):
    return -(-a // b)


def _round_up(x, m):
    return _cdiv(x, m) * m


def _tpu_generation():
    try:
        kind = jax.devices()[0].device_kind.lower()
    except Exception:
        return 0
    for tag, gen in (("v7", 7), ("v6", 6), ("v5", 5)):
        if tag in kind:
            return gen
    return 0


def _budget_for_generation(gen):
    """(per-buffer tile target bytes, scoped-VMEM cap bytes) per TPU gen."""
    if gen >= 7:
        return 4 << 20, 48 << 20    # 64 MiB physical VMEM: stay well under it
    if gen == 6:
        return 6 << 20, 96 << 20    # 128 MiB physical VMEM: bigger tiles OK
    if gen == 5:
        return 2 << 20, 64 << 20    # already HBM-bound; just lift 16 MiB default
    return 4 << 20, 48 << 20        # unknown chip: conservative


def _choose_tiles(n_rows, n_lanes, max_item, sublane, target_bytes):
    """Pick a (tm, tl) block: tm a multiple of `sublane` (or full extent),
    tl a multiple of 128 (or full extent), each buffer <= target_bytes,
    and at least 2 (preferably an even number of) grid steps when possible."""
    # Lane tile: full width if a sublane-group of full rows fits the budget.
    if n_lanes <= 128 or n_lanes * sublane * max_item <= target_bytes:
        tl = n_lanes
    else:
        tl = (target_bytes // (sublane * max_item)) // 128 * 128
        tl = max(128, min(tl, _round_up(n_lanes, 128)))

    # Row tile: as many sublane-groups as fit the budget.
    budget_rows = (target_bytes // max(tl * max_item, 1)) // sublane * sublane
    budget_rows = max(sublane, budget_rows)
    tm = n_rows if n_rows <= budget_rows else budget_rows

    # Guarantee >= 2 grid steps so megacore (v7x) can shard the grid.
    rs, ls = _cdiv(n_rows, tm), _cdiv(n_lanes, tl)
    if rs * ls == 1:
        if n_lanes >= 256:
            tl = max(128, (n_lanes // 2) // 128 * 128)
        elif n_rows >= 2 * sublane:
            tm = _round_up(_cdiv(n_rows, 2), sublane)
        rs, ls = _cdiv(n_rows, tm), _cdiv(n_lanes, tl)

    # Prefer an even total step count (best-effort).
    if rs * ls > 1 and (rs * ls) % 2 == 1:
        if ls > 1:
            new_tl = _round_up(_cdiv(n_lanes, ls + 1), 128)
            if new_tl >= 128 and _cdiv(n_lanes, new_tl) % 2 == 0:
                tl = new_tl
        elif rs > 1:
            new_tm = _round_up(_cdiv(n_rows, rs + 1), sublane)
            if new_tm >= sublane and _cdiv(n_rows, new_tm) % 2 == 0:
                tm = new_tm

    return int(tm), int(tl)


# ---------------------------------------------------------------------------
# Wrapper
# ---------------------------------------------------------------------------
def _normalize_2d_pair_impl(pv, art, mean, std):
    """Normalize two NCHW tensors per-channel in one fused Pallas call."""
    assert pv.shape == art.shape, "pv/art images must share a shape"
    B, C, H, W = pv.shape
    N, L = B * C, H * W

    mean = jnp.broadcast_to(jnp.asarray(mean, jnp.float32).reshape(-1), (C,))
    std = jnp.broadcast_to(jnp.asarray(std, jnp.float32).reshape(-1), (C,))

    # Row r of the (B*C, H*W) view has channel c = r % C.  Pack per-row
    # (mean, 1/std) into ONE small input so only one tiny DMA tracks the grid.
    ms = jnp.stack([mean, 1.0 / std], axis=-1)   # (C, 2)
    ms_rows = jnp.tile(ms, (B, 1))               # (N, 2)

    pv2d = pv.reshape(N, L)
    art2d = art.reshape(N, L)
    pv_item = pv2d.dtype.itemsize
    art_item = art2d.dtype.itemsize

    # Dtype-aware sublane packing granularity: 8 for f32, 16 for bf16, 32 for i8.
    sublane = max(8, 32 // min(pv_item, art_item))
    max_item = max(pv_item, art_item)

    target_bytes, vmem_cap = _budget_for_generation(_tpu_generation())
    tm, tl = _choose_tiles(N, L, max_item, sublane, target_bytes)

    grid = (_cdiv(N, tm), _cdiv(L, tl))   # lane axis innermost -> ms block reused

    img_spec = pl.BlockSpec((tm, tl), lambda i, j: (i, j))
    ms_spec = pl.BlockSpec((tm, 2), lambda i, j: (i, 0))

    # Double-buffered working set: 4 big streams (pv/art in+out) + ms block
    # (lane-padded to 128), plus headroom; clamp to the per-generation cap.
    vmem_needed = 2 * tm * tl * (2 * pv_item + 2 * art_item) + 2 * tm * 128 * 4
    vmem_limit = max(vmem_needed + (4 << 20), 32 << 20)
    vmem_limit = min(vmem_limit, vmem_cap)
    vmem_limit = max(vmem_limit, vmem_needed + (1 << 20))

    pv_out, art_out = pl.pallas_call(
        _normalize_pair_kernel,
        out_shape=(
            jax.ShapeDtypeStruct((N, L), pv.dtype),
            jax.ShapeDtypeStruct((N, L), art.dtype),
        ),
        grid_spec=pltpu.PrefetchScalarGridSpec(
            num_scalar_prefetch=0,
            grid=grid,
            in_specs=[ms_spec, img_spec, img_spec],
            out_specs=(img_spec, img_spec),
        ),
        compiler_params=pltpu.CompilerParams(
            dimension_semantics=("parallel", "parallel"),
            vmem_limit_bytes=int(vmem_limit),
        ),
        # In-place (PyTorch-style) semantics: pv2d -> pv_out, art2d -> art_out.
        input_output_aliases={1: 0, 2: 1},
    )(ms_rows, pv2d, art2d)

    return pv_out.reshape(B, C, H, W), art_out.reshape(B, C, H, W)


# Donate the image buffers to get true in-place behaviour (matches the
# PyTorch module's in-place F.normalize) and avoid extra HBM allocations.
normalize_2d_pair = jax.jit(_normalize_2d_pair_impl, donate_argnums=(0, 1))


class Normalize2d:
    """JAX/Pallas equivalent of the PyTorch Normalize_2d module.

    JAX is functional, so the normalized tensors are returned as new arrays
    (backed by the donated input buffers); masks pass through unchanged.
    """

    def __init__(self, mean, std):
        self.mean = jnp.asarray(mean, dtype=jnp.float32)
        self.std = jnp.asarray(std, dtype=jnp.float32)

    def __call__(self, pv_imgs, art_imgs, pv_mask=None, art_mask=None):
        pv_out, art_out = normalize_2d_pair(pv_imgs, art_imgs, self.mean, self.std)
        return (pv_out, art_out, pv_mask, art_mask)


if __name__ == "__main__":
    key = jax.random.PRNGKey(0)
    k1, k2, k3, k4 = jax.random.split(key, 4)

    B, C, H, W = 2, 4, 16, 16
    pv_imgs = jax.random.normal(k1, (B, C, H, W), dtype=jnp.float32)
    art_imgs = jax.random.normal(k2, (B, C, H, W), dtype=jnp.float32)
    pv_mask = (jax.random.uniform(k3, (B, 1, H, W)) > 0.5).astype(jnp.float32)
    art_mask = (jax.random.uniform(k4, (B, 1, H, W)) > 0.5).astype(jnp.float32)

    mean = jnp.array([0.1, 0.2, 0.3, 0.4], dtype=jnp.float32)
    std = jnp.array([0.5, 0.6, 0.7, 0.8], dtype=jnp.float32)

    # Reference computed BEFORE the kernel call, since the kernel donates
    # (consumes) the input buffers to emulate PyTorch's in-place semantics.
    ref_pv = (pv_imgs - mean[None, :, None, None]) / std[None, :, None, None]
    ref_art = (art_imgs - mean[None, :, None, None]) / std[None, :, None, None]

    module = Normalize2d(mean, std)
    pv_out, art_out, pv_m, art_m = module(pv_imgs, art_imgs, pv_mask, art_mask)
    jax.block_until_ready((pv_out, art_out))

    assert jnp.allclose(pv_out, ref_pv, atol=1e-5, rtol=1e-5), "pv mismatch"
    assert jnp.allclose(art_out, ref_art, atol=1e-5, rtol=1e-5), "art mismatch"
    assert pv_m is pv_mask and art_m is art_mask

    print("KERNEL_OK")
</pallas_src>

<mosaic_0001>
module attributes {stable_mosaic.version = 11 : i64} {
  func.func @_normalize_pair_kernel(%arg0: i32, %arg1: i32, %arg2: memref<8x2xf32, #tpu.memory_space<vmem>>, %arg3: memref<8x128xf32, #tpu.memory_space<vmem>>, %arg4: memref<8x128xf32, #tpu.memory_space<vmem>>, %arg5: memref<8x128xf32, #tpu.memory_space<vmem>>, %arg6: memref<8x128xf32, #tpu.memory_space<vmem>>) attributes {dimension_semantics = [#tpu.dimension_semantics<parallel>, #tpu.dimension_semantics<parallel>], iteration_bounds = array<i64: 1, 2>, scalar_prefetch = 0 : i64, scratch_operands = 0 : i64, tpu.core_type = #tpu.core_type<tc>, window_params = [{transform_indices = @transform_0, window_bounds = array<i64: 8, 2>}, {transform_indices = @transform_1, window_bounds = array<i64: 8, 128>}, {transform_indices = @transform_2, window_bounds = array<i64: 8, 128>}, {transform_indices = @transform_3, window_bounds = array<i64: 8, 128>}, {transform_indices = @transform_4, window_bounds = array<i64: 8, 128>}]} {
    %c0 = arith.constant 0 : index
    %c0_0 = arith.constant 0 : index
    %0 = vector.load %arg2[%c0, %c0_0] : memref<8x2xf32, #tpu.memory_space<vmem>>, vector<8x1xf32>
    %c0_1 = arith.constant 0 : index
    %c1 = arith.constant 1 : index
    %1 = vector.load %arg2[%c0_1, %c1] : memref<8x2xf32, #tpu.memory_space<vmem>>, vector<8x1xf32>
    %c0_2 = arith.constant 0 : index
    %c0_3 = arith.constant 0 : index
    %2 = vector.load %arg3[%c0_2, %c0_3] : memref<8x128xf32, #tpu.memory_space<vmem>>, vector<8x128xf32>
    %c0_4 = arith.constant 0 : index
    %c0_5 = arith.constant 0 : index
    %3 = vector.load %arg4[%c0_4, %c0_5] : memref<8x128xf32, #tpu.memory_space<vmem>>, vector<8x128xf32>
    %4 = vector.broadcast %0 : vector<8x1xf32> to vector<8x128xf32>
    %5 = arith.subf %2, %4 : vector<8x128xf32>
    %6 = vector.broadcast %1 : vector<8x1xf32> to vector<8x128xf32>
    %7 = arith.mulf %5, %6 : vector<8x128xf32>
    %c0_6 = arith.constant 0 : index
    %c0_7 = arith.constant 0 : index
    %8 = vector.load %arg5[%c0_6, %c0_7] : memref<8x128xf32, #tpu.memory_space<vmem>>, vector<8x128xf32>
    tpu.vector_store %arg5[%c0_6, %c0_7], %7 {strides = array<i32>} : memref<8x128xf32, #tpu.memory_space<vmem>>, vector<8x128xf32>,
    %9 = vector.broadcast %0 : vector<8x1xf32> to vector<8x128xf32>
    %10 = arith.subf %3, %9 : vector<8x128xf32>
    %11 = vector.broadcast %1 : vector<8x1xf32> to vector<8x128xf32>
    %12 = arith.mulf %10, %11 : vector<8x128xf32>
    %c0_8 = arith.constant 0 : index
    %c0_9 = arith.constant 0 : index
    %13 = vector.load %arg6[%c0_8, %c0_9] : memref<8x128xf32, #tpu.memory_space<vmem>>, vector<8x128xf32>
    tpu.vector_store %arg6[%c0_8, %c0_9], %12 {strides = array<i32>} : memref<8x128xf32, #tpu.memory_space<vmem>>, vector<8x128xf32>,
    return
  }
  func.func @transform_0(%arg0: i32, %arg1: i32) -> (i32, i32) {
    %c0_i32 = arith.constant 0 : i32
    %c0_i32_0 = arith.constant 0 : i32
    return %arg0, %c0_i32 : i32, i32
  }
  func.func @transform_1(%arg0: i32, %arg1: i32) -> (i32, i32) {
    %c0_i32 = arith.constant 0 : i32
    return %arg0, %arg1 : i32, i32
  }
  func.func @transform_2(%arg0: i32, %arg1: i32) -> (i32, i32) {
    %c0_i32 = arith.constant 0 : i32
    return %arg0, %arg1 : i32, i32
  }
  func.func @transform_3(%arg0: i32, %arg1: i32) -> (i32, i32) {
    %c0_i32 = arith.constant 0 : i32
    return %arg0, %arg1 : i32, i32
  }
  func.func @transform_4(%arg0: i32, %arg1: i32) -> (i32, i32) {
    %c0_i32 = arith.constant 0 : i32
    return %arg0, %arg1 : i32, i32
  }
}

</mosaic_0001>

<llo_original>
// kernel: _normalize_2d_pair_impl.1
$region0: #{_normalize_2d_pair_impl.1}
  #allocation0 [shape = 'u32[]', space=smem, size = 0x4, offset = 0x4, fixed_abs, tag = 'smem constant byte address 0x4 - core index']
  #allocation1 [shape = 'u32[144,128]{1,0:T(1,128)}', space=vmem, size = 0x12000, scoped, tag = 'internal scratch']
  %s0 = inlined_call_operand.vmem [shape: f32[8,2], index: 0, kind: input, shape index: {}]
  %s1 = inlined_call_operand.vmem [shape: f32[8,256], index: 1, kind: input, shape index: {}, may-alias: {1,3}]
  %s2 = inlined_call_operand.vmem [shape: f32[8,256], index: 2, kind: input, shape index: {}, may-alias: {2,4}]
  %s3 = inlined_call_operand.vmem [shape: f32[8,256], index: 3, kind: output, shape index: {0}, may-alias: {1,3}]
  %s4 = inlined_call_operand.vmem [shape: f32[8,256], index: 4, kind: output, shape index: {1}, may-alias: {2,4}]
  %5 = xla_tuple %s3, %s4
  %s6 = sld [smem:[#allocation0]]
  $region53: #{_normalize_2d_pair_impl.1} parent=0
    _
  %s8 = ssub.s32 1, %s6
  %s9 = scalar_select 0, %s8, %s6
  loop: start=0, step=1, limit=4
  $region2: #{_normalize_2d_pair_impl.1} parent=0 // loop_pre_header
    _
  $region3: #{_normalize_2d_pair_impl.1} parent=0 // loop_header
    %s11 = sphi 0, %s15
    %p12 = scmp.ge.s32.totalorder %s11, 4
    %s18 = sphi 0, %s30
    %s19 = sphi 0, %s26
    %s20 = sphi 0, %s18
    %s21 = sphi 0, %s19
    %s22 = sphi 0, %s20
    %s23 = sphi 0, %s21
    %s33 = sphi 0, %s35
    %s36 = sphi 0, %s33
    %s37 = sphi 0, %s36
    %s53 = sphi 0, %s37
    %s61 = sphi 0, %s63
    %s64 = sphi 0, %s61
    %s65 = sphi 0, %s64
    %s81 = sphi 0, %s65
    %s89 = sphi 0, %s91
    %s92 = sphi 0, %s89
    %s93 = sphi 0, %s92
    %s109 = sphi 0, %s93
    %s117 = sphi 0, %s119
    %s120 = sphi 0, %s117
    %s121 = sphi 0, %s120
    %s137 = sphi 0, %s121
    %s145 = sphi 0, %s147
    %s148 = sphi 0, %s145
    %s149 = sphi 0, %s148
    %s165 = sphi 0, %s149
  $region4: #{_normalize_2d_pair_impl.1} parent=0 // loop_header_branch
    %14 = sbr.rel (%p12) target = $region8
  $region5: #{_normalize_2d_pair_impl.1} parent=0 // loop_body
    %s16 = ssub.s32 %s11, 1
    %s17 = ssub.s32 %s11, 2
    %s24 = sadd.s32 1, %s19
    %p25 = scmp.ge.s32.totalorder %s24, 2
    %s26 = scalar_select %p25, 0, %s24
    %s27 = sadd.s32 1, %s18
    %s28 = scalar_select %p25, %s27, %s18
    %p29 = scmp.ge.s32.totalorder %s28, 1
    %s30 = scalar_select %p29, 0, %s28
    %s31 = ssub.s32 %s18, %s30
    %p32 = scmp.eq.s32.totalorder %s31, 0
    %s34 = sadd.s32 %s33, 1
    %s35 = scalar_select %p32, %s33, %s34
    %p38 = pneg %p32
    %p39 = scmp.eq.s32.totalorder %s11, 1
    %p40 = por %p38, %p39
    %p41 = scmp.ne.s32.totalorder %s33, %s36
    %p42 = scmp.eq.s32.totalorder %s11, 0
    %p43 = por %p41, %p42
    %p44 = scmp.ne.s32.totalorder %s33, %s36
    %p45 = scmp.eq.s32.totalorder %s16, 1
    %p46 = por %p44, %p45
    %p47 = scmp.ne.s32.totalorder %s36, %s37
    %p48 = scmp.eq.s32.totalorder %s16, 0
    %p49 = por %p47, %p48
    %p50 = scmp.ne.s32.totalorder %s36, %s37
    %p51 = scmp.eq.s32.totalorder %s17, 1
    %p52 = por %p50, %p51
    %p54 = scmp.ne.s32.totalorder %s37, %s53
    %p55 = scmp.eq.s32.totalorder %s17, 0
    %p56 = por %p54, %p55
    %s57 = ssub.s32 %s18, %s30
    %s58 = ssub.s32 %s19, %s26
    %s59 = sor.u32 %s57, %s58
    %p60 = scmp.eq.s32.totalorder %s59, 0
    %s62 = sadd.s32 %s61, 1
    %s63 = scalar_select %p60, %s61, %s62
    %p66 = pneg %p60
    %p67 = scmp.eq.s32.totalorder %s11, 1
    %p68 = por %p66, %p67
    %p69 = scmp.ne.s32.totalorder %s61, %s64
    %p70 = scmp.eq.s32.totalorder %s11, 0
    %p71 = por %p69, %p70
    %p72 = scmp.ne.s32.totalorder %s61, %s64
    %p73 = scmp.eq.s32.totalorder %s16, 1
    %p74 = por %p72, %p73
    %p75 = scmp.ne.s32.totalorder %s64, %s65
    %p76 = scmp.eq.s32.totalorder %s16, 0
    %p77 = por %p75, %p76
    %p78 = scmp.ne.s32.totalorder %s64, %s65
    %p79 = scmp.eq.s32.totalorder %s17, 1
    %p80 = por %p78, %p79
    %p82 = scmp.ne.s32.totalorder %s65, %s81
    %p83 = scmp.eq.s32.totalorder %s17, 0
    %p84 = por %p82, %p83
    %s85 = ssub.s32 %s18, %s30
    %s86 = ssub.s32 %s19, %s26
    %s87 = sor.u32 %s85, %s86
    %p88 = scmp.eq.s32.totalorder %s87, 0
    %s90 = sadd.s32 %s89, 1
    %s91 = scalar_select %p88, %s89, %s90
    %p94 = pneg %p88
    %p95 = scmp.eq.s32.totalorder %s11, 1
    %p96 = por %p94, %p95
    %p97 = scmp.ne.s32.totalorder %s89, %s92
    %p98 = scmp.eq.s32.totalorder %s11, 0
    %p99 = por %p97, %p98
    %p100 = scmp.ne.s32.totalorder %s89, %s92
    %p101 = scmp.eq.s32.totalorder %s16, 1
    %p102 = por %p100, %p101
    %p103 = scmp.ne.s32.totalorder %s92, %s93
    %p104 = scmp.eq.s32.totalorder %s16, 0
    %p105 = por %p103, %p104
    %p106 = scmp.ne.s32.totalorder %s92, %s93
    %p107 = scmp.eq.s32.totalorder %s17, 1
    %p108 = por %p106, %p107
    %p110 = scmp.ne.s32.totalorder %s93, %s109
    %p111 = scmp.eq.s32.totalorder %s17, 0
    %p112 = por %p110, %p111
    %s113 = ssub.s32 %s18, %s30
    %s114 = ssub.s32 %s19, %s26
    %s115 = sor.u32 %s113, %s114
    %p116 = scmp.eq.s32.totalorder %s115, 0
    %s118 = sadd.s32 %s117, 1
    %s119 = scalar_select %p116, %s117, %s118
    %p122 = pneg %p116
    %p123 = scmp.eq.s32.totalorder %s11, 1
    %p124 = por %p122, %p123
    %p125 = scmp.ne.s32.totalorder %s117, %s120
    %p126 = scmp.eq.s32.totalorder %s11, 0
    %p127 = por %p125, %p126
    %p128 = scmp.ne.s32.totalorder %s117, %s120
    %p129 = scmp.eq.s32.totalorder %s16, 1
    %p130 = por %p128, %p129
    %p131 = scmp.ne.s32.totalorder %s120, %s121
    %p132 = scmp.eq.s32.totalorder %s16, 0
    %p133 = por %p131, %p132
    %p134 = scmp.ne.s32.totalorder %s120, %s121
    %p135 = scmp.eq.s32.totalorder %s17, 1
    %p136 = por %p134, %p135
    %p138 = scmp.ne.s32.totalorder %s121, %s137
    %p139 = scmp.eq.s32.totalorder %s17, 0
    %p140 = por %p138, %p139
    %s141 = ssub.s32 %s18, %s30
    %s142 = ssub.s32 %s19, %s26
    %s143 = sor.u32 %s141, %s142
    %p144 = scmp.eq.s32.totalorder %s143, 0
    %s146 = sadd.s32 %s145, 1
    %s147 = scalar_select %p144, %s145, %s146
    %p150 = pneg %p144
    %p151 = scmp.eq.s32.totalorder %s11, 1
    %p152 = por %p150, %p151
    %p153 = scmp.ne.s32.totalorder %s145, %s148
    %p154 = scmp.eq.s32.totalorder %s11, 0
    %p155 = por %p153, %p154
    %p156 = scmp.ne.s32.totalorder %s145, %s148
    %p157 = scmp.eq.s32.totalorder %s16, 1
    %p158 = por %p156, %p157
    %p159 = scmp.ne.s32.totalorder %s148, %s149
    %p160 = scmp.eq.s32.totalorder %s16, 0
    %p161 = por %p159, %p160
    %p162 = scmp.ne.s32.totalorder %s148, %s149
    %p163 = scmp.eq.s32.totalorder %s17, 1
    %p164 = por %p162, %p163
    %p166 = scmp.ne.s32.totalorder %s149, %s165
    %p167 = scmp.eq.s32.totalorder %s17, 0
    %p168 = por %p166, %p167
    %p169 = scmp.le.s32.totalorder 1, %s11
    %p170 = scmp.lt.s32.totalorder %s11, 3
    %p171 = pnand %p169, %p170
    %p172 = pneg %p171
    // Predicated region
    $region9: #{_normalize_2d_pair_impl.1} parent=5 // pred_check
      _
    $region10: #{_normalize_2d_pair_impl.1} parent=5 // pred_check_branch
      %174 = sbr.rel (%p171) target = $region12
    $region11: #{_normalize_2d_pair_impl.1} parent=5 // pred_region
      %s175 = ssub.s32 %s11, 1
      // Predicated region
      $region13: #{_normalize_2d_pair_impl.1} parent=11 // pred_check
        %p176 = pneg %p49
      $region14: #{_normalize_2d_pair_impl.1} parent=11 // pred_check_branch
        %178 = sbr.rel (%p176) target = $region16
      $region15: #{_normalize_2d_pair_impl.1} parent=11 // pred_region
        %p179 = scmp.lt.s32.totalorder %s20, 0
        %s180 = scalar_select %p179, %s20, 0
        %s181 = smul.addr %s180, 8
        %s182 = scalar_lea.vmem %s0, %s181
      $region16: #{_normalize_2d_pair_impl.1} parent=11 // pred_fallthru
        _
    $region12: #{_normalize_2d_pair_impl.1} parent=5 // pred_fallthru
      _
    %p183 = scmp.lt.s32.totalorder %s11, 2
    // Predicated region
    $region17: #{_normalize_2d_pair_impl.1} parent=5 // pred_check
      %p184 = pneg %p183
    $region18: #{_normalize_2d_pair_impl.1} parent=5 // pred_check_branch
      %186 = sbr.rel (%p184) target = $region20
    $region19: #{_normalize_2d_pair_impl.1} parent=5 // pred_region
      // Predicated region
      $region21: #{_normalize_2d_pair_impl.1} parent=19 // pred_check
        %p187 = pneg %p71
      $region22: #{_normalize_2d_pair_impl.1} parent=19 // pred_check_branch
        %189 = sbr.rel (%p187) target = $region24
      $region23: #{_normalize_2d_pair_impl.1} parent=19 // pred_region
        %p190 = scmp.lt.s32.totalorder %s18, 0
        %s191 = scalar_select %p190, %s18, 0
        %p192 = scmp.lt.s32.totalorder %s19, 1
        %s193 = scalar_select %p192, %s19, 1
        %s194 = smul.addr %s191, 2
        %s195 = sadd.s32 %s193, %s194
        %s196 = smul.addr %s195, 8
        %s197 = scalar_lea.vmem %s1, %s196
      $region24: #{_normalize_2d_pair_impl.1} parent=19 // pred_fallthru
        _
      // Predicated region
      $region25: #{_normalize_2d_pair_impl.1} parent=19 // pred_check
        %p198 = pneg %p99
      $region26: #{_normalize_2d_pair_impl.1} parent=19 // pred_check_branch
        %200 = sbr.rel (%p198) target = $region28
      $region27: #{_normalize_2d_pair_impl.1} parent=19 // pred_region
        %p201 = scmp.lt.s32.totalorder %s18, 0
        %s202 = scalar_select %p201, %s18, 0
        %p203 = scmp.lt.s32.totalorder %s19, 1
        %s204 = scalar_select %p203, %s19, 1
        %s205 = smul.addr %s202, 2
        %s206 = sadd.s32 %s204, %s205
        %s207 = smul.addr %s206, 8
        %s208 = scalar_lea.vmem %s2, %s207
      $region28: #{_normalize_2d_pair_impl.1} parent=19 // pred_fallthru
        _
    $region20: #{_normalize_2d_pair_impl.1} parent=5 // pred_fallthru
      _
    %p209 = scmp.le.s32.totalorder 1, %s11
    %p210 = scmp.lt.s32.totalorder %s11, 3
    %p211 = pnand %p209, %p210
    %p212 = pneg %p211
    // Predicated region
    $region29: #{_normalize_2d_pair_impl.1} parent=5 // pred_check
      _
    $region30: #{_normalize_2d_pair_impl.1} parent=5 // pred_check_branch
      %214 = sbr.rel (%p211) target = $region32
    $region31: #{_normalize_2d_pair_impl.1} parent=5 // pred_region
      %s215 = ssub.s32 %s11, 1
      %p216 = scmp.lt.s32.totalorder %s20, 0
      %s217 = scalar_select %p216, %s20, 0
      %s218 = smul.addr %s217, 8
      %s219 = scalar_lea.vmem %s0, %s218
      %p220 = pneg %p49
      %p221 = pneg %p46
      %p222 = scmp.lt.s32.totalorder %s20, 0
      %s223 = scalar_select %p222, %s20, 0
      %p224 = scmp.lt.s32.totalorder %s21, 1
      %s225 = scalar_select %p224, %s21, 1
      %s226 = smul.addr %s223, 2
      %s227 = sadd.s32 %s225, %s226
      %s228 = smul.addr %s227, 8
      %s229 = scalar_lea.vmem %s1, %s228
      %p230 = pneg %p77
      %p231 = pneg %p74
      %p232 = scmp.lt.s32.totalorder %s20, 0
      %s233 = scalar_select %p232, %s20, 0
      %p234 = scmp.lt.s32.totalorder %s21, 1
      %s235 = scalar_select %p234, %s21, 1
      %s236 = smul.addr %s233, 2
      %s237 = sadd.s32 %s235, %s236
      %s238 = smul.addr %s237, 8
      %s239 = scalar_lea.vmem %s2, %s238
      %p240 = pneg %p105
      %p241 = pneg %p102
      %p242 = pneg %p133
      %p243 = pneg %p130
      %p244 = scmp.lt.s32.totalorder %s20, 0
      %s245 = scalar_select %p244, %s20, 0
      %p246 = scmp.lt.s32.totalorder %s21, 1
      %s247 = scalar_select %p246, %s21, 1
      %s248 = smul.addr %s245, 2
      %s249 = sadd.s32 %s247, %s248
      %s250 = smul.addr %s249, 8
      %s251 = scalar_lea.vmem %s3, %s250
      %p252 = pneg %p161
      %p253 = pneg %p158
      %p254 = scmp.lt.s32.totalorder %s20, 0
      %s255 = scalar_select %p254, %s20, 0
      %p256 = scmp.lt.s32.totalorder %s21, 1
      %s257 = scalar_select %p256, %s21, 1
      %s258 = smul.addr %s255, 2
      %s259 = sadd.s32 %s257, %s258
      %s260 = smul.addr %s259, 8
      %s261 = scalar_lea.vmem %s4, %s260
      %p262 = scmp.lt.s32.totalorder %s20, 0
      %s263 = scalar_select %p262, %s20, 0
      %s264 = smul.addr %s263, 8
      %s265 = scalar_lea.vmem %s0, %s264
      %p266 = scmp.lt.s32.totalorder %s20, 0
      %s267 = scalar_select %p266, %s20, 0
      %p268 = scmp.lt.s32.totalorder %s21, 1
      %s269 = scalar_select %p268, %s21, 1
      %s270 = smul.addr %s267, 2
      %s271 = sadd.s32 %s269, %s270
      %s272 = smul.addr %s271, 8
      %s273 = scalar_lea.vmem %s1, %s272
      %p274 = scmp.lt.s32.totalorder %s20, 0
      %s275 = scalar_select %p274, %s20, 0
      %p276 = scmp.lt.s32.totalorder %s21, 1
      %s277 = scalar_select %p276, %s21, 1
      %s278 = smul.addr %s275, 2
      %s279 = sadd.s32 %s277, %s278
      %s280 = smul.addr %s279, 8
      %s281 = scalar_lea.vmem %s2, %s280
      %p282 = scmp.lt.s32.totalorder %s20, 0
      %s283 = scalar_select %p282, %s20, 0
      %p284 = scmp.lt.s32.totalorder %s21, 1
      %s285 = scalar_select %p284, %s21, 1
      %s286 = smul.addr %s283, 2
      %s287 = sadd.s32 %s285, %s286
      %s288 = smul.addr %s287, 8
      %s289 = scalar_lea.vmem %s3, %s288
      %p290 = scmp.lt.s32.totalorder %s20, 0
      %s291 = scalar_select %p290, %s20, 0
      %p292 = scmp.lt.s32.totalorder %s21, 1
      %s293 = scalar_select %p292, %s21, 1
      %s294 = smul.addr %s291, 2
      %s295 = sadd.s32 %s293, %s294
      %s296 = smul.addr %s295, 8
      %s297 = scalar_lea.vmem %s4, %s296
      %v298 = vld [vmem:[%s265] sm:$0xff]
      %v299 = vld [vmem:[%s273] sm:$0xff]
      %v300 = vld [vmem:[%s281] sm:$0xff]
      %302 = vset.pattern.permute.xlu0 0
      %303 = vperm.xlu0 %302, %v298
      %v304 = vpop.permute.xlu0 %303
      %v306 = vsub.f32 %v299, %v304
      %307 = vset.pattern.permute.xlu0 1
      %308 = vperm.xlu0 %307, %v298
      %v309 = vpop.permute.xlu0 %308
      %v311 = vmul.f32 %v306, %v309
      %312 = vst [vmem:[%s289] sm:$0xff] %v311
      %v313 = vsub.f32 %v300, %v304
      %v314 = vmul.f32 %v313, %v309
      %315 = vst [vmem:[%s297] sm:$0xff] %v314
      %p316 = scmp.lt.s32.totalorder %s20, 0
      %s317 = scalar_select %p316, %s20, 0
      %p318 = scmp.lt.s32.totalorder %s21, 1
      %s319 = scalar_select %p318, %s21, 1
      %s320 = smul.addr %s317, 2
      %s321 = sadd.s32 %s319, %s320
      %s322 = smul.addr %s321, 8
      %s323 = scalar_lea.vmem %s3, %s322
      %p324 = scmp.lt.s32.totalorder %s20, 0
      %s325 = scalar_select %p324, %s20, 0
      %p326 = scmp.lt.s32.totalorder %s21, 1
      %s327 = scalar_select %p326, %s21, 1
      %s328 = smul.addr %s325, 2
      %s329 = sadd.s32 %s327, %s328
      %s330 = smul.addr %s329, 8
      %s331 = scalar_lea.vmem %s4, %s330
      // Predicated region
      $region33: #{_normalize_2d_pair_impl.1} parent=31 // pred_check
        %p332 = pneg %p130
      $region34: #{_normalize_2d_pair_impl.1} parent=31 // pred_check_branch
        %334 = sbr.rel (%p332) target = $region36
      $region35: #{_normalize_2d_pair_impl.1} parent=31 // pred_region
        _
      $region36: #{_normalize_2d_pair_impl.1} parent=31 // pred_fallthru
        _
      // Predicated region
      $region37: #{_normalize_2d_pair_impl.1} parent=31 // pred_check
        %p335 = pneg %p158
      $region38: #{_normalize_2d_pair_impl.1} parent=31 // pred_check_branch
        %337 = sbr.rel (%p335) target = $region40
      $region39: #{_normalize_2d_pair_impl.1} parent=31 // pred_region
        _
      $region40: #{_normalize_2d_pair_impl.1} parent=31 // pred_fallthru
        _
    $region32: #{_normalize_2d_pair_impl.1} parent=5 // pred_fallthru
      _
    %p338 = scmp.le.s32.totalorder 2, %s11
    // Predicated region
    $region41: #{_normalize_2d_pair_impl.1} parent=5 // pred_check
      %p339 = pneg %p338
    $region42: #{_normalize_2d_pair_impl.1} parent=5 // pred_check_branch
      %341 = sbr.rel (%p339) target = $region44
    $region43: #{_normalize_2d_pair_impl.1} parent=5 // pred_region
      %s342 = ssub.s32 %s11, 2
      // Predicated region
      $region45: #{_normalize_2d_pair_impl.1} parent=43 // pred_check
        %p343 = pneg %p136
      $region46: #{_normalize_2d_pair_impl.1} parent=43 // pred_check_branch
        %345 = sbr.rel (%p343) target = $region48
      $region47: #{_normalize_2d_pair_impl.1} parent=43 // pred_region
        %p346 = scmp.lt.s32.totalorder %s22, 0
        %s347 = scalar_select %p346, %s22, 0
        %p348 = scmp.lt.s32.totalorder %s23, 1
        %s349 = scalar_select %p348, %s23, 1
        %s350 = smul.addr %s347, 2
        %s351 = sadd.s32 %s349, %s350
        %s352 = smul.addr %s351, 8
        %s353 = scalar_lea.vmem %s3, %s352
      $region48: #{_normalize_2d_pair_impl.1} parent=43 // pred_fallthru
        _
      // Predicated region
      $region49: #{_normalize_2d_pair_impl.1} parent=43 // pred_check
        %p354 = pneg %p164
      $region50: #{_normalize_2d_pair_impl.1} parent=43 // pred_check_branch
        %356 = sbr.rel (%p354) target = $region52
      $region51: #{_normalize_2d_pair_impl.1} parent=43 // pred_region
        %p357 = scmp.lt.s32.totalorder %s22, 0
        %s358 = scalar_select %p357, %s22, 0
        %p359 = scmp.lt.s32.totalorder %s23, 1
        %s360 = scalar_select %p359, %s23, 1
        %s361 = smul.addr %s358, 2
        %s362 = sadd.s32 %s360, %s361
        %s363 = smul.addr %s362, 8
        %s364 = scalar_lea.vmem %s4, %s363
      $region52: #{_normalize_2d_pair_impl.1} parent=43 // pred_fallthru
        _
    $region44: #{_normalize_2d_pair_impl.1} parent=5 // pred_fallthru
      _
  $region6: #{_normalize_2d_pair_impl.1} parent=0 // loop_footer
    %s15 = sadd.s32 1, %s11
  $region7: #{_normalize_2d_pair_impl.1} parent=0 // loop_footer_branch
    %10 = sbr.rel target = $region3
  $region8: #{_normalize_2d_pair_impl.1} parent=0 // loop_exit
    _

</llo_original>
